<compile_context>
chip_gen: v5e
topology: v5e:2x2
jax: 0.10.0
libtpu: 0.0.40
codegen_flags: <defaults>
</compile_context>

<pallas_src>
import functools

import jax
import jax.numpy as jnp
from jax.experimental import pallas as pl
from jax.experimental.pallas import tpu as pltpu


def _jnet_kernel(tx_ref, w1_ref, b1_ref, w2_ref, b2_ref, w3_ref, b3_ref,
                 o_ref, *, act_dtype):
    # tx_ref : (2, TB)  f32   row 0 = t, row 1 = x (batch on lanes)
    # w1_ref : (H, 2)   f32   transposed first-layer weight
    # b1_ref : (H, 1)   f32
    # w2_ref : (H, H)   act   transposed second-layer weight
    # b2_ref : (H, 1)   f32
    # w3_ref : (1, H)   act   transposed third-layer weight
    # b3_ref : (1, 1)   f32
    # o_ref  : (1, TB)  f32   lane-dense store
    t = tx_ref[0:1, :]                                   # (1, TB)
    x = tx_ref[1:2, :]                                   # (1, TB)

    # Layer 1 (input_dim = 2): VPU broadcast FMAs in f32, tanh in act_dtype.
    pre1 = w1_ref[:, 0:1] * t + w1_ref[:, 1:2] * x + b1_ref[...]   # (H, TB) f32
    h1 = jnp.tanh(pre1.astype(act_dtype))                          # (H, TB) act

    # Layer 2 (H x H): MXU matmul, f32 accumulate, f32 bias, tanh in act_dtype.
    pre2 = jnp.dot(w2_ref[...], h1,
                   preferred_element_type=jnp.float32) + b2_ref[...]  # (H, TB) f32
    h2 = jnp.tanh(pre2.astype(act_dtype))                             # (H, TB) act

    # Layer 3 (out = 1): (1,H) @ (H,TB) on the (idle) MXU, f32 accumulate.
    out = jnp.dot(w3_ref[...], h2,
                  preferred_element_type=jnp.float32) + b3_ref[...]   # (1, TB)
    o_ref[...] = out.astype(o_ref.dtype)


def _default_act_dtype():
    """bf16 tanh/matmul operands on chips with bf16 VPU/EUP (v6e/v7x), f32 on
    older generations (v5e and earlier have no bf16 vector/transcendental path)."""
    try:
        kind = jax.devices()[0].device_kind.lower()
    except Exception:  # pragma: no cover - defensive
        kind = ""
    if any(tag in kind for tag in ("v2", "v3", "v4", "v5")):
        return jnp.float32
    return jnp.bfloat16


def jnet_forward(t, x, params, *, tile_b=2048, act_dtype=None):
    """Replicates JNet.forward: promote t/x to (B,1), run the MLP, return (B,1)."""
    if act_dtype is None:
        act_dtype = _default_act_dtype()

    w1, b1, w2, b2, w3, b3 = params  # weights stored (in, out); biases (1, out)

    def to_col(a):
        a = jnp.asarray(a, jnp.float32)
        if a.ndim == 0:
            a = a[None, None]
        elif a.ndim == 1:
            a = a[:, None]
        return a

    t2 = to_col(t)                                     # (B, 1)
    x2 = to_col(x)                                     # (B, 1)
    B = t2.shape[0]
    H = w1.shape[1]

    # Batch tile: multiple of 128 (lane-dense), capped at tile_b.
    TB = max(128, min(tile_b, -(-B // 128) * 128))
    Bp = -(-B // TB) * TB
    # Guarantee >=2 grid steps when the batch allows it so v7x can shard the
    # "parallel" axis across both TensorCores (no-op on single-TC v5e/v6e).
    if Bp // TB == 1 and Bp >= 256:
        TB = max(128, ((TB // 2) // 128) * 128)
        Bp = -(-B // TB) * TB
    grid = (Bp // TB,)

    # Kernel-side parameter layouts (tiny, one-time transposes / casts).
    w1t = jnp.asarray(w1, jnp.float32).T                            # (H, 2) f32
    b1c = jnp.asarray(b1, jnp.float32).reshape(H, 1)                # (H, 1) f32
    w2t = jnp.asarray(w2, jnp.float32).T.astype(act_dtype)          # (H, H) act
    b2c = jnp.asarray(b2, jnp.float32).reshape(H, 1)                # (H, 1) f32
    w3t = jnp.asarray(w3, jnp.float32).reshape(1, H).astype(act_dtype)  # (1, H) act
    b3c = jnp.asarray(b3, jnp.float32).reshape(1, 1)                # (1, 1) f32

    # Pack t and x into one lane-dense (2, Bp) stream (single per-step DMA).
    tx_rows = jnp.concatenate([t2.reshape(1, B), x2.reshape(1, B)], axis=0)
    tx_rows = jnp.pad(tx_rows, ((0, 0), (0, Bp - B)))               # (2, Bp)

    stream_in = pl.BlockSpec((2, TB), lambda i: (0, i))             # tiled on batch
    stream_out = pl.BlockSpec((1, TB), lambda i: (0, i))            # lane-dense vst
    resident = lambda shape: pl.BlockSpec(shape, lambda i: (0, 0))  # VMEM-resident

    out_row = pl.pallas_call(
        functools.partial(_jnet_kernel, act_dtype=act_dtype),
        out_shape=jax.ShapeDtypeStruct((1, Bp), jnp.float32),
        grid=grid,
        in_specs=[
            stream_in,            # packed (t, x)
            resident((H, 2)),     # w1^T
            resident((H, 1)),     # b1
            resident((H, H)),     # w2^T
            resident((H, 1)),     # b2
            resident((1, H)),     # w3^T
            resident((1, 1)),     # b3
        ],
        out_specs=stream_out,
        compiler_params=pltpu.CompilerParams(
            dimension_semantics=("parallel",),
            vmem_limit_bytes=32 * 1024 * 1024,
        ),
    )(tx_rows, w1t, b1c, w2t, b2c, w3t, b3c)

    return out_row[:, :B].T, act_dtype                              # (B, 1)


def init_jnet_params(key, state_dim=1, hidden_dim=64):
    """Deterministic synthetic parameters (shapes match the nn.Linear layers)."""
    input_dim = 1 + state_dim
    k1, k2, k3, k4, k5, k6 = jax.random.split(key, 6)
    # weights stored (in, out); biases broadcast as (1, out)
    w1 = jax.random.normal(k1, (input_dim, hidden_dim), jnp.float32) * 0.5
    b1 = jax.random.normal(k2, (1, hidden_dim), jnp.float32) * 0.1
    w2 = jax.random.normal(k3, (hidden_dim, hidden_dim), jnp.float32) * 0.1
    b2 = jax.random.normal(k4, (1, hidden_dim), jnp.float32) * 0.1
    w3 = jax.random.normal(k5, (hidden_dim, 1), jnp.float32) * 0.1
    b3 = jax.random.normal(k6, (1, 1), jnp.float32) * 0.1
    return (w1, b1, w2, b2, w3, b3)


def _reference(t, x, params):
    w1, b1, w2, b2, w3, b3 = params
    tx = jnp.concatenate((t[:, None], x[:, None]), axis=1)
    h = jnp.tanh(tx @ w1 + b1)
    h = jnp.tanh(h @ w2 + b2)
    return h @ w3 + b3


def _tol(act_dtype):
    # f32 path matches the reference almost exactly; bf16 activations/operands
    # (deliberate speed trade on v6e/v7x) need a relaxed tolerance.
    return (2e-2, 2e-2) if act_dtype == jnp.bfloat16 else (1e-5, 1e-5)


if __name__ == "__main__":
    key = jax.random.PRNGKey(0)
    kp, kt, kx, kt2, kx2 = jax.random.split(key, 5)

    state_dim, hidden_dim = 1, 64
    params = init_jnet_params(kp, state_dim=state_dim, hidden_dim=hidden_dim)

    # Small case (matches the module's typical usage): 1-D t and x of batch 8.
    batch = 8
    t = jax.random.uniform(kt, (batch,), jnp.float32)
    x = jax.random.normal(kx, (batch,), jnp.float32)

    out, act_dt = jnet_forward(t, x, params)
    out = jax.block_until_ready(out)
    ref = _reference(t, x, params)
    atol, rtol = _tol(act_dt)
    assert out.shape == (batch, 1)
    assert jnp.allclose(out, ref, atol=atol, rtol=rtol)

    # Multi-tile case: exercises the batch grid, padding, the >=2-step split
    # and the VMEM-resident weights.
    batch2 = 300
    t2 = jax.random.uniform(kt2, (batch2,), jnp.float32)
    x2 = jax.random.normal(kx2, (batch2,), jnp.float32)
    out2, act_dt2 = jnet_forward(t2, x2, params, tile_b=2048)
    out2 = jax.block_until_ready(out2)
    ref2 = _reference(t2, x2, params)
    atol2, rtol2 = _tol(act_dt2)
    assert out2.shape == (batch2, 1)
    assert jnp.allclose(out2, ref2, atol=atol2, rtol=rtol2)

    print("KERNEL_OK")
</pallas_src>

<mosaic_0001>
module attributes {stable_mosaic.version = 11 : i64} {
  func.func @_jnet_kernel(%arg0: i32, %arg1: memref<2x128xf32, #tpu.memory_space<vmem>>, %arg2: memref<64x2xf32, #tpu.memory_space<vmem>>, %arg3: memref<64x1xf32, #tpu.memory_space<vmem>>, %arg4: memref<64x64xbf16, #tpu.memory_space<vmem>>, %arg5: memref<64x1xf32, #tpu.memory_space<vmem>>, %arg6: memref<1x64xbf16, #tpu.memory_space<vmem>>, %arg7: memref<1x1xf32, #tpu.memory_space<vmem>>, %arg8: memref<1x128xf32, #tpu.memory_space<vmem>>) attributes {dimension_semantics = [#tpu.dimension_semantics<parallel>], iteration_bounds = array<i64: 1>, scalar_prefetch = 0 : i64, scratch_operands = 0 : i64, tpu.core_type = #tpu.core_type<tc>, window_params = [{transform_indices = @transform_0, window_bounds = array<i64: 2, 128>}, {pipeline_mode = #tpu.pipeline_mode<synchronous>, transform_indices = @transform_1, window_bounds = array<i64: 64, 2>}, {pipeline_mode = #tpu.pipeline_mode<synchronous>, transform_indices = @transform_2, window_bounds = array<i64: 64, 1>}, {pipeline_mode = #tpu.pipeline_mode<synchronous>, transform_indices = @transform_3, window_bounds = array<i64: 64, 64>}, {pipeline_mode = #tpu.pipeline_mode<synchronous>, transform_indices = @transform_4, window_bounds = array<i64: 64, 1>}, {pipeline_mode = #tpu.pipeline_mode<synchronous>, transform_indices = @transform_5, window_bounds = array<i64: 1, 64>}, {pipeline_mode = #tpu.pipeline_mode<synchronous>, transform_indices = @transform_6, window_bounds = array<i64: 1, 1>}, {transform_indices = @transform_7, window_bounds = array<i64: 1, 128>}]} {
    %c0 = arith.constant 0 : index
    %c0_0 = arith.constant 0 : index
    %0 = vector.load %arg1[%c0, %c0_0] : memref<2x128xf32, #tpu.memory_space<vmem>>, vector<1x128xf32>
    %c1 = arith.constant 1 : index
    %c0_1 = arith.constant 0 : index
    %1 = vector.load %arg1[%c1, %c0_1] : memref<2x128xf32, #tpu.memory_space<vmem>>, vector<1x128xf32>
    %c0_2 = arith.constant 0 : index
    %c0_3 = arith.constant 0 : index
    %2 = vector.load %arg2[%c0_2, %c0_3] : memref<64x2xf32, #tpu.memory_space<vmem>>, vector<64x1xf32>
    %3 = vector.broadcast %2 : vector<64x1xf32> to vector<64x128xf32>
    %4 = vector.broadcast %0 : vector<1x128xf32> to vector<64x128xf32>
    %5 = arith.mulf %3, %4 : vector<64x128xf32>
    %c0_4 = arith.constant 0 : index
    %c1_5 = arith.constant 1 : index
    %6 = vector.load %arg2[%c0_4, %c1_5] : memref<64x2xf32, #tpu.memory_space<vmem>>, vector<64x1xf32>
    %7 = vector.broadcast %6 : vector<64x1xf32> to vector<64x128xf32>
    %8 = vector.broadcast %1 : vector<1x128xf32> to vector<64x128xf32>
    %9 = arith.mulf %7, %8 : vector<64x128xf32>
    %10 = arith.addf %5, %9 : vector<64x128xf32>
    %c0_6 = arith.constant 0 : index
    %c0_7 = arith.constant 0 : index
    %11 = vector.load %arg3[%c0_6, %c0_7] : memref<64x1xf32, #tpu.memory_space<vmem>>, vector<64x1xf32>
    %12 = vector.broadcast %11 : vector<64x1xf32> to vector<64x128xf32>
    %13 = arith.addf %10, %12 : vector<64x128xf32>
    %14 = arith.truncf %13 : vector<64x128xf32> to vector<64x128xbf16>
    %15 = math.tanh %14 : vector<64x128xbf16>
    %c0_8 = arith.constant 0 : index
    %c0_9 = arith.constant 0 : index
    %16 = vector.load %arg4[%c0_8, %c0_9] : memref<64x64xbf16, #tpu.memory_space<vmem>>, vector<64x64xbf16>
    %cst = arith.constant dense<0.000000e+00> : vector<64x128xf32>
    %17 = tpu.matmul %16, %15, %cst {dimension_numbers = #tpu.dot_dimension_numbers<[1], [0], [0], [1], [0, 0, 1, 1], [], []>} : vector<64x64xbf16>, vector<64x128xbf16>, vector<64x128xf32> -> vector<64x128xf32>
    %c0_10 = arith.constant 0 : index
    %c0_11 = arith.constant 0 : index
    %18 = vector.load %arg5[%c0_10, %c0_11] : memref<64x1xf32, #tpu.memory_space<vmem>>, vector<64x1xf32>
    %19 = vector.broadcast %18 : vector<64x1xf32> to vector<64x128xf32>
    %20 = arith.addf %17, %19 : vector<64x128xf32>
    %21 = arith.truncf %20 : vector<64x128xf32> to vector<64x128xbf16>
    %22 = math.tanh %21 : vector<64x128xbf16>
    %c0_12 = arith.constant 0 : index
    %c0_13 = arith.constant 0 : index
    %23 = vector.load %arg6[%c0_12, %c0_13] : memref<1x64xbf16, #tpu.memory_space<vmem>>, vector<1x64xbf16>
    %cst_14 = arith.constant dense<0.000000e+00> : vector<1x128xf32>
    %24 = tpu.matmul %23, %22, %cst_14 {dimension_numbers = #tpu.dot_dimension_numbers<[1], [0], [0], [1], [0, 0, 1, 1], [], []>} : vector<1x64xbf16>, vector<64x128xbf16>, vector<1x128xf32> -> vector<1x128xf32>
    %c0_15 = arith.constant 0 : index
    %c0_16 = arith.constant 0 : index
    %25 = vector.load %arg7[%c0_15, %c0_16] : memref<1x1xf32, #tpu.memory_space<vmem>>, vector<1x1xf32>
    %26 = vector.broadcast %25 : vector<1x1xf32> to vector<1x128xf32>
    %27 = arith.addf %24, %26 : vector<1x128xf32>
    %c0_17 = arith.constant 0 : index
    %c0_18 = arith.constant 0 : index
    %28 = vector.load %arg8[%c0_17, %c0_18] : memref<1x128xf32, #tpu.memory_space<vmem>>, vector<1x128xf32>
    tpu.vector_store %arg8[%c0_17, %c0_18], %27 {strides = array<i32>} : memref<1x128xf32, #tpu.memory_space<vmem>>, vector<1x128xf32>,
    return
  }
  func.func @transform_0(%arg0: i32) -> (i32, i32) {
    %c0_i32 = arith.constant 0 : i32
    %c0_i32_0 = arith.constant 0 : i32
    return %c0_i32, %arg0 : i32, i32
  }
  func.func @transform_1(%arg0: i32) -> (i32, i32) {
    %c0_i32 = arith.constant 0 : i32
    %c0_i32_0 = arith.constant 0 : i32
    %c0_i32_1 = arith.constant 0 : i32
    return %c0_i32, %c0_i32_0 : i32, i32
  }
  func.func @transform_2(%arg0: i32) -> (i32, i32) {
    %c0_i32 = arith.constant 0 : i32
    %c0_i32_0 = arith.constant 0 : i32
    %c0_i32_1 = arith.constant 0 : i32
    return %c0_i32, %c0_i32_0 : i32, i32
  }
  func.func @transform_3(%arg0: i32) -> (i32, i32) {
    %c0_i32 = arith.constant 0 : i32
    %c0_i32_0 = arith.constant 0 : i32
    %c0_i32_1 = arith.constant 0 : i32
    return %c0_i32, %c0_i32_0 : i32, i32
  }
  func.func @transform_4(%arg0: i32) -> (i32, i32) {
    %c0_i32 = arith.constant 0 : i32
    %c0_i32_0 = arith.constant 0 : i32
    %c0_i32_1 = arith.constant 0 : i32
    return %c0_i32, %c0_i32_0 : i32, i32
  }
  func.func @transform_5(%arg0: i32) -> (i32, i32) {
    %c0_i32 = arith.constant 0 : i32
    %c0_i32_0 = arith.constant 0 : i32
    %c0_i32_1 = arith.constant 0 : i32
    return %c0_i32, %c0_i32_0 : i32, i32
  }
  func.func @transform_6(%arg0: i32) -> (i32, i32) {
    %c0_i32 = arith.constant 0 : i32
    %c0_i32_0 = arith.constant 0 : i32
    %c0_i32_1 = arith.constant 0 : i32
    return %c0_i32, %c0_i32_0 : i32, i32
  }
  func.func @transform_7(%arg0: i32) -> (i32, i32) {
    %c0_i32 = arith.constant 0 : i32
    %c0_i32_0 = arith.constant 0 : i32
    return %c0_i32, %arg0 : i32, i32
  }
}

</mosaic_0001>

<llo_original>
// kernel: tpu_custom_call.1
$region0: #{tpu_custom_call.1}
  #allocation0 [shape = 'u32[]', space=smem, size = 0x4, offset = 0x4, fixed_abs, tag = 'smem constant byte address 0x4 - core index']
  #allocation1 [shape = 'u32[72,128]{1,0:T(1,128)}', space=vmem, size = 0x9000, scoped, tag = 'internal scratch']
  #allocation2 [shape = 'f32[1,1]{1,0:T(1,128)S(1)}', space=vmem, size = 0x200, scoped, tag = 'scoped memory for tpu_custom_call.1']
  %s0 = inlined_call_operand.vmem [shape: f32[2,128], index: 0, kind: input, shape index: {}]
  %s1 = inlined_call_operand.vmem [shape: f32[64,2], index: 1, kind: input, shape index: {}]
  %s2 = inlined_call_operand.vmem [shape: f32[64,1], index: 2, kind: input, shape index: {}]
  %s3 = inlined_call_operand.vmem [shape: bf16[64,64], index: 3, kind: input, shape index: {}]
  %s4 = inlined_call_operand.vmem [shape: f32[64,1], index: 4, kind: input, shape index: {}]
  %s5 = inlined_call_operand.vmem [shape: bf16[1,64], index: 5, kind: input, shape index: {}]
  %s6 = inlined_call_operand.<no memory space> [shape: f32[1,1], index: 6, kind: input, shape index: {}]
  %s7 = inlined_call_operand.hbm [shape: f32[1,128], index: 7, kind: output, shape index: {}]
  %s8 = sld [smem:[#allocation0]]
  $region38: #{tpu_custom_call.1} parent=0
    _
  %s10 = ssub.s32 1, %s8
  %s11 = scalar_select 0, %s10, %s8
  %v12 = vstv %s6
  %13 = vst [vmem:[#allocation2] sm:$0x1] %v12
  $region1: #{tpu_custom_call.1} parent=0
    #allocation3 [shape = 'u8[512]{0}', space=vmem, size = 0x400, scoped, tag = 'output window, operand 0, single buffered']
    #allocation4 [shape = 's32[1]{0}', space=sflag, size = 0x4, scoped, tag = 'scoped memory for tpu_custom_call.1']
    %14 = vsyncpa [#allocation4], 0
    // Predicated region
    $region2: #{tpu_custom_call.1} parent=1 // pred_check
      _
    $region3: #{tpu_custom_call.1} parent=1 // pred_check_branch
      %16 = sbr.rel (0) target = $region5
    $region4: #{tpu_custom_call.1} parent=1 // pred_region
      _
    $region5: #{tpu_custom_call.1} parent=1 // pred_fallthru
      _
    // Predicated region
    $region6: #{tpu_custom_call.1} parent=1 // pred_check
      _
    $region7: #{tpu_custom_call.1} parent=1 // pred_check_branch
      %18 = sbr.rel (0) target = $region9
    $region8: #{tpu_custom_call.1} parent=1 // pred_region
      _
    $region9: #{tpu_custom_call.1} parent=1 // pred_fallthru
      _
    // Predicated region
    $region10: #{tpu_custom_call.1} parent=1 // pred_check
      _
    $region11: #{tpu_custom_call.1} parent=1 // pred_check_branch
      %20 = sbr.rel (0) target = $region13
    $region12: #{tpu_custom_call.1} parent=1 // pred_region
      _
    $region13: #{tpu_custom_call.1} parent=1 // pred_fallthru
      _
    // Predicated region
    $region14: #{tpu_custom_call.1} parent=1 // pred_check
      _
    $region15: #{tpu_custom_call.1} parent=1 // pred_check_branch
      %22 = sbr.rel (0) target = $region17
    $region16: #{tpu_custom_call.1} parent=1 // pred_region
      _
    $region17: #{tpu_custom_call.1} parent=1 // pred_fallthru
      _
    // Predicated region
    $region18: #{tpu_custom_call.1} parent=1 // pred_check
      _
    $region19: #{tpu_custom_call.1} parent=1 // pred_check_branch
      %24 = sbr.rel (0) target = $region21
    $region20: #{tpu_custom_call.1} parent=1 // pred_region
      _
    $region21: #{tpu_custom_call.1} parent=1 // pred_fallthru
      _
    // Predicated region
    $region22: #{tpu_custom_call.1} parent=1 // pred_check
      _
    $region23: #{tpu_custom_call.1} parent=1 // pred_check_branch
      %26 = sbr.rel (0) target = $region25
    $region24: #{tpu_custom_call.1} parent=1 // pred_region
      _
    $region25: #{tpu_custom_call.1} parent=1 // pred_fallthru
      _
    // Predicated region
    $region26: #{tpu_custom_call.1} parent=1 // pred_check
      _
    $region27: #{tpu_custom_call.1} parent=1 // pred_check_branch
      %28 = sbr.rel (0) target = $region29
    $region28: #{tpu_custom_call.1} parent=1 // pred_region
      _
    $region29: #{tpu_custom_call.1} parent=1 // pred_fallthru
      _
    %v30 = vld [vmem:[%s0] sm:$0x1]
    %v31 = vld [vmem:[%s0 + $0x1] sm:$0x1]
    %v32 = vld [vmem:[%s1] sm:$0xff]
    %v33 = vld [vmem:[%s1 + $0x8] sm:$0xff]
    %v34 = vld [vmem:[%s1 + $0x10] sm:$0xff]
    %v35 = vld [vmem:[%s1 + $0x18] sm:$0xff]
    %v36 = vld [vmem:[%s1 + $0x20] sm:$0xff]
    %v37 = vld [vmem:[%s1 + $0x28] sm:$0xff]
    %v38 = vld [vmem:[%s1 + $0x30] sm:$0xff]
    %v39 = vld [vmem:[%s1 + $0x38] sm:$0xff]
    %41 = vset.pattern.permute.xlu0 0
    %42 = vperm.xlu0 %41, %v32
    %v43 = vpop.permute.xlu0 %42
    %46 = vset.pattern.permute.xlu0 0
    %47 = vperm.xlu0 %46, %v33
    %v48 = vpop.permute.xlu0 %47
    %51 = vset.pattern.permute.xlu0 0
    %52 = vperm.xlu0 %51, %v34
    %v53 = vpop.permute.xlu0 %52
    %56 = vset.pattern.permute.xlu0 0
    %57 = vperm.xlu0 %56, %v35
    %v58 = vpop.permute.xlu0 %57
    %61 = vset.pattern.permute.xlu0 0
    %62 = vperm.xlu0 %61, %v36
    %v63 = vpop.permute.xlu0 %62
    %66 = vset.pattern.permute.xlu0 0
    %67 = vperm.xlu0 %66, %v37
    %v68 = vpop.permute.xlu0 %67
    %71 = vset.pattern.permute.xlu0 0
    %72 = vperm.xlu0 %71, %v38
    %v73 = vpop.permute.xlu0 %72
    %76 = vset.pattern.permute.xlu0 0
    %77 = vperm.xlu0 %76, %v39
    %v78 = vpop.permute.xlu0 %77
    %v80 = vperm.slane %v30, 0
    %v81 = vmul.f32 %v43, %v80
    %v82 = vmul.f32 %v48, %v80
    %v83 = vmul.f32 %v53, %v80
    %v84 = vmul.f32 %v58, %v80
    %v85 = vmul.f32 %v63, %v80
    %v86 = vmul.f32 %v68, %v80
    %v87 = vmul.f32 %v73, %v80
    %v88 = vmul.f32 %v78, %v80
    %89 = vset.pattern.permute.xlu0 1
    %90 = vperm.xlu0 %89, %v32
    %v91 = vpop.permute.xlu0 %90
    %93 = vset.pattern.permute.xlu0 1
    %94 = vperm.xlu0 %93, %v33
    %v95 = vpop.permute.xlu0 %94
    %97 = vset.pattern.permute.xlu0 1
    %98 = vperm.xlu0 %97, %v34
    %v99 = vpop.permute.xlu0 %98
    %101 = vset.pattern.permute.xlu0 1
    %102 = vperm.xlu0 %101, %v35
    %v103 = vpop.permute.xlu0 %102
    %105 = vset.pattern.permute.xlu0 1
    %106 = vperm.xlu0 %105, %v36
    %v107 = vpop.permute.xlu0 %106
    %109 = vset.pattern.permute.xlu0 1
    %110 = vperm.xlu0 %109, %v37
    %v111 = vpop.permute.xlu0 %110
    %113 = vset.pattern.permute.xlu0 1
    %114 = vperm.xlu0 %113, %v38
    %v115 = vpop.permute.xlu0 %114
    %117 = vset.pattern.permute.xlu0 1
    %118 = vperm.xlu0 %117, %v39
    %v119 = vpop.permute.xlu0 %118
    %v121 = vperm.slane %v31, 0
    %v122 = vmul.f32 %v91, %v121
    %v123 = vmul.f32 %v95, %v121
    %v124 = vmul.f32 %v99, %v121
    %v125 = vmul.f32 %v103, %v121
    %v126 = vmul.f32 %v107, %v121
    %v127 = vmul.f32 %v111, %v121
    %v128 = vmul.f32 %v115, %v121
    %v129 = vmul.f32 %v119, %v121
    %v130 = vadd.f32 %v81, %v122
    %v131 = vadd.f32 %v82, %v123
    %v132 = vadd.f32 %v83, %v124
    %v133 = vadd.f32 %v84, %v125
    %v134 = vadd.f32 %v85, %v126
    %v135 = vadd.f32 %v86, %v127
    %v136 = vadd.f32 %v87, %v128
    %v137 = vadd.f32 %v88, %v129
    %v138 = vld [vmem:[%s2] sm:$0xff]
    %v139 = vld [vmem:[%s2 + $0x8] sm:$0xff]
    %v140 = vld [vmem:[%s2 + $0x10] sm:$0xff]
    %v141 = vld [vmem:[%s2 + $0x18] sm:$0xff]
    %v142 = vld [vmem:[%s2 + $0x20] sm:$0xff]
    %v143 = vld [vmem:[%s2 + $0x28] sm:$0xff]
    %v144 = vld [vmem:[%s2 + $0x30] sm:$0xff]
    %v145 = vld [vmem:[%s2 + $0x38] sm:$0xff]
    %147 = vset.pattern.permute.xlu0 0
    %148 = vperm.xlu0 %147, %v138
    %v149 = vpop.permute.xlu0 %148
    %152 = vset.pattern.permute.xlu0 0
    %153 = vperm.xlu0 %152, %v139
    %v154 = vpop.permute.xlu0 %153
    %157 = vset.pattern.permute.xlu0 0
    %158 = vperm.xlu0 %157, %v140
    %v159 = vpop.permute.xlu0 %158
    %162 = vset.pattern.permute.xlu0 0
    %163 = vperm.xlu0 %162, %v141
    %v164 = vpop.permute.xlu0 %163
    %167 = vset.pattern.permute.xlu0 0
    %168 = vperm.xlu0 %167, %v142
    %v169 = vpop.permute.xlu0 %168
    %172 = vset.pattern.permute.xlu0 0
    %173 = vperm.xlu0 %172, %v143
    %v174 = vpop.permute.xlu0 %173
    %177 = vset.pattern.permute.xlu0 0
    %178 = vperm.xlu0 %177, %v144
    %v179 = vpop.permute.xlu0 %178
    %182 = vset.pattern.permute.xlu0 0
    %183 = vperm.xlu0 %182, %v145
    %v184 = vpop.permute.xlu0 %183
    %v186 = vadd.f32 %v130, %v149
    %v187 = vadd.f32 %v131, %v154
    %v188 = vadd.f32 %v132, %v159
    %v189 = vadd.f32 %v133, %v164
    %v190 = vadd.f32 %v134, %v169
    %v191 = vadd.f32 %v135, %v174
    %v192 = vadd.f32 %v136, %v179
    %v193 = vadd.f32 %v137, %v184
    %v194 = vpack.c.bf16 %v187, %v186
    %v195 = vpack.c.bf16 %v189, %v188
    %v196 = vpack.c.bf16 %v191, %v190
    %v197 = vpack.c.bf16 %v193, %v192
    %v198 = vunpack.c.l.bf16 %v194
    %v199 = vunpack.c.h.bf16 %v194
    %v200 = vunpack.c.l.bf16 %v195
    %v201 = vunpack.c.h.bf16 %v195
    %v202 = vunpack.c.l.bf16 %v196
    %v203 = vunpack.c.h.bf16 %v196
    %v204 = vunpack.c.l.bf16 %v197
    %v205 = vunpack.c.h.bf16 %v197
    %v206 = vtanh.pop %v198
    %v207 = vtanh.pop %v199
    %v208 = vtanh.pop %v200
    %v209 = vtanh.pop %v201
    %v210 = vtanh.pop %v202
    %v211 = vtanh.pop %v203
    %v212 = vtanh.pop %v204
    %v213 = vtanh.pop %v205
    %v214 = vpack.c.bf16 %v207, %v206
    %v215 = vpack.c.bf16 %v209, %v208
    %v216 = vpack.c.bf16 %v211, %v210
    %v217 = vpack.c.bf16 %v213, %v212
    %v218 = vld [vmem:[%s3] sm:$0xf]
    %v219 = vld [vmem:[%s3 + $0x4] sm:$0xf]
    %v220 = vld [vmem:[%s3 + $0x8] sm:$0xf]
    %v221 = vld [vmem:[%s3 + $0xc] sm:$0xf]
    %v222 = vld [vmem:[%s3 + $0x10] sm:$0xf]
    %v223 = vld [vmem:[%s3 + $0x14] sm:$0xf]
    %v224 = vld [vmem:[%s3 + $0x18] sm:$0xf]
    %v225 = vld [vmem:[%s3 + $0x1c] sm:$0xf]
    %v226 = vld [vmem:[%s4] sm:$0xff]
    %v227 = vld [vmem:[%s4 + $0x8] sm:$0xff]
    %v228 = vld [vmem:[%s4 + $0x10] sm:$0xff]
    %v229 = vld [vmem:[%s4 + $0x18] sm:$0xff]
    %v230 = vld [vmem:[%s4 + $0x20] sm:$0xff]
    %v231 = vld [vmem:[%s4 + $0x28] sm:$0xff]
    %v232 = vld [vmem:[%s4 + $0x30] sm:$0xff]
    %v233 = vld [vmem:[%s4 + $0x38] sm:$0xff]
    %235 = vset.pattern.permute.xlu0 0
    %236 = vperm.xlu0 %235, %v226
    %v237 = vpop.permute.xlu0 %236
    %240 = vset.pattern.permute.xlu0 0
    %241 = vperm.xlu0 %240, %v227
    %v242 = vpop.permute.xlu0 %241
    %245 = vset.pattern.permute.xlu0 0
    %246 = vperm.xlu0 %245, %v228
    %v247 = vpop.permute.xlu0 %246
    %250 = vset.pattern.permute.xlu0 0
    %251 = vperm.xlu0 %250, %v229
    %v252 = vpop.permute.xlu0 %251
    %255 = vset.pattern.permute.xlu0 0
    %256 = vperm.xlu0 %255, %v230
    %v257 = vpop.permute.xlu0 %256
    %260 = vset.pattern.permute.xlu0 0
    %261 = vperm.xlu0 %260, %v231
    %v262 = vpop.permute.xlu0 %261
    %265 = vset.pattern.permute.xlu0 0
    %266 = vperm.xlu0 %265, %v232
    %v267 = vpop.permute.xlu0 %266
    %270 = vset.pattern.permute.xlu0 0
    %271 = vperm.xlu0 %270, %v233
    %v272 = vpop.permute.xlu0 %271
    %v282 = vunpack.c.l.b16 %v218
    %v283 = vunpack.c.l.b16 %v219
    %v284 = vunpack.c.l.b16 %v220
    %v285 = vunpack.c.l.b16 %v221
    %v286 = vunpack.c.l.b16 %v222
    %v287 = vunpack.c.l.b16 %v223
    %v288 = vunpack.c.l.b16 %v224
    %v289 = vunpack.c.l.b16 %v225
    %v290 = vpack.c.b16 %v283, %v282
    %v291 = vpack.c.b16 %v285, %v284
    %v292 = vpack.c.b16 %v287, %v286
    %v293 = vpack.c.b16 %v289, %v288
    %vm294 = vcmask 523264
    %v296 = vsel %vm294, %v290, 0
    %v299 = vsel %vm294, %v291, 0
    %v302 = vsel %vm294, %v292, 0
    %v305 = vsel %vm294, %v293, 0
    %307 = vmatpush.bf16.msra.mxu0 0
    %308 = vmatpush.bf16.msra.mxu0 0
    %309 = vmatpush.bf16.msra.mxu0 0
    %310 = vmatpush.bf16.msra.mxu0 0
    %311 = vmatpush.bf16.msra.mxu0 %v217
    %312 = vmatpush.bf16.msra.mxu0 %v216
    %313 = vmatpush.bf16.msra.mxu0 %v215
    %314 = vmatpush.bf16.msra.mxu0 %v214
    %315 = vmatmul.bf16.gmra.mxu0 %v296
    %v316 = vpop.f32.mrf.mxu0
    %v317 = vadd.f32 %v237, %v316
    %v318 = vpop.f32.mrf.mxu0
    %v319 = vadd.f32 %v242, %v318
    %320 = vmatmul.bf16.gmra.mxu0 %v299
    %v321 = vpop.f32.mrf.mxu0
    %v322 = vadd.f32 %v247, %v321
    %v323 = vpop.f32.mrf.mxu0
    %v324 = vadd.f32 %v252, %v323
    %325 = vmatmul.bf16.gmra.mxu0 %v302
    %v326 = vpop.f32.mrf.mxu0
    %v327 = vadd.f32 %v257, %v326
    %v328 = vpop.f32.mrf.mxu0
    %v329 = vadd.f32 %v262, %v328
    %330 = vmatmul.bf16.gmra.mxu0 %v305
    %v331 = vpop.f32.mrf.mxu0
    %v332 = vadd.f32 %v267, %v331
    %v333 = vpop.f32.mrf.mxu0
    %v334 = vadd.f32 %v272, %v333
    %335 = vdwg.mxu0
    %v336 = vpack.c.bf16 %v319, %v317
    %v337 = vpack.c.bf16 %v324, %v322
    %v338 = vpack.c.bf16 %v329, %v327
    %v339 = vpack.c.bf16 %v334, %v332
    %v340 = vunpack.c.l.bf16 %v336
    %v341 = vunpack.c.h.bf16 %v336
    %v342 = vunpack.c.l.bf16 %v337
    %v343 = vunpack.c.h.bf16 %v337
    %v344 = vunpack.c.l.bf16 %v338
    %v345 = vunpack.c.h.bf16 %v338
    %v346 = vunpack.c.l.bf16 %v339
    %v347 = vunpack.c.h.bf16 %v339
    %v348 = vtanh.pop %v340
    %v349 = vtanh.pop %v341
    %v350 = vtanh.pop %v342
    %v351 = vtanh.pop %v343
    %v352 = vtanh.pop %v344
    %v353 = vtanh.pop %v345
    %v354 = vtanh.pop %v346
    %v355 = vtanh.pop %v347
    %v356 = vpack.c.bf16 %v349, %v348
    %v357 = vpack.c.bf16 %v351, %v350
    %v358 = vpack.c.bf16 %v353, %v352
    %v359 = vpack.c.bf16 %v355, %v354
    %v360 = vld [vmem:[%s5] sm:$0x1]
    %v361 = vld [vmem:[#allocation2] sm:$0x1]
    %363 = vset.pattern.permute.xlu0 0
    %364 = vperm.xlu0 %363, %v361
    %v365 = vpop.permute.xlu0 %364
    %v367 = vperm.slane %v365, 0
    %v369 = vsel %vm294, %v360, 0
    %371 = vmatpush.bf16.msra.mxu0 0
    %372 = vmatpush.bf16.msra.mxu0 0
    %373 = vmatpush.bf16.msra.mxu0 0
    %374 = vmatpush.bf16.msra.mxu0 0
    %375 = vmatpush.bf16.msra.mxu0 %v359
    %376 = vmatpush.bf16.msra.mxu0 %v358
    %377 = vmatpush.bf16.msra.mxu0 %v357
    %378 = vmatpush.bf16.msra.mxu0 %v356
    %379 = vmatmul.bf16.gmra.mxu0 %v369
    %v380 = vpop.f32.mrf.mxu0
    %v381 = vadd.f32 %v367, %v380
    %v382 = vpop.f32.mrf.mxu0
    %383 = vdwg.mxu0
    %384 = vst [vmem:[#allocation3] sm:$0x1] %v381
    // Predicated region
    $region30: #{tpu_custom_call.1} parent=1 // pred_check
      _
    $region31: #{tpu_custom_call.1} parent=1 // pred_check_branch
      %386 = sbr.rel (0) target = $region33
    $region32: #{tpu_custom_call.1} parent=1 // pred_region
      %388 = vsyncadd [#allocation4], 0
      %s390 = sshll.u32 [#allocation3], 4
      %s391 = int_to_ptr.vmem [resolvable:$true] %s390
      %s392 = sshll.u32 %s7, 4
      %s393 = int_to_ptr.hbm [resolvable:$true] %s392
      %395 = dma.vmem_to_hbm [thread:$0]  %s391, 16, %s393, [#allocation4]
    $region33: #{tpu_custom_call.1} parent=1 // pred_fallthru
      _
    // Predicated region
    $region34: #{tpu_custom_call.1} parent=1 // pred_check
      _
    $region35: #{tpu_custom_call.1} parent=1 // pred_check_branch
      %397 = sbr.rel (0) target = $region37
    $region36: #{tpu_custom_call.1} parent=1 // pred_region
      %399 = dma.done [#allocation4], 16
    $region37: #{tpu_custom_call.1} parent=1 // pred_fallthru
      _
    %400 = vsyncpa [#allocation4], 1

</llo_original>
